<compile_context>
chip_gen: v6e
topology: v6e:2x2x1
jax: 0.10.0
libtpu: 0.0.40
codegen_flags: <defaults>
</compile_context>

<pallas_src>
import functools

import jax
import jax.numpy as jnp
from jax.experimental import pallas as pl
from jax.experimental.pallas import tpu as pltpu


# ----------------------------- Pallas kernel --------------------------------
def attention_gate_kernel(g_ref, xcol_ref, xflat_ref, wg_ref, wx_ref, wa_ref,
                          b_ref, ba_ref, uh_ref, uwt_ref, out_ref,
                          att2d_ref, upflat_ref, *, n_hg, n_wg, n_hx, n_wx):
    # 1x1 conv on g and 3x3 stride-2 pad-1 conv on x, both as channel matmuls
    # with the flattened spatial dim (Sg) on the MXU N / lane axis.
    g_feat = jnp.dot(wg_ref[...], g_ref[0], preferred_element_type=jnp.float32)
    x_feat = jnp.dot(wx_ref[...], xcol_ref[0], preferred_element_type=jnp.float32)

    # Folded bias (bg + bx) broadcast along lanes, then ReLU.
    fsum = jnp.maximum(g_feat + x_feat + b_ref[...], 0.0)            # (Cx, Sg)

    # 1x1 conv to one attention channel (+ scalar bias from SMEM), then sigmoid.
    att = jnp.dot(wa_ref[...], fsum,
                  preferred_element_type=jnp.float32) + ba_ref[0, 0]  # (1, Sg)
    att = 1.0 / (1.0 + jnp.exp(-att))

    # Separable bilinear x2 upsample: up2d = Uh @ att2d @ Uw^T.
    # The (1, Sg) -> (Hg, Wg) repack is done with static row copies through a
    # VMEM scratch (avoids relying on in-kernel reshape lowering).
    for h in range(n_hg):
        att2d_ref[h:h + 1, :] = att[:, h * n_wg:(h + 1) * n_wg]
    t = jnp.dot(att2d_ref[...], uwt_ref[...],
                preferred_element_type=jnp.float32)                   # (Hg, Wx)
    up2d = jnp.dot(uh_ref[...], t, preferred_element_type=jnp.float32)  # (Hx, Wx)

    # (Hx, Wx) -> (1, Sx) flat gate, again via static row copies into scratch.
    for h in range(n_hx):
        upflat_ref[:, h * n_wx:(h + 1) * n_wx] = up2d[h:h + 1, :]

    # Gate the skip connection: one lane-dense (Cx, Sx) store.
    out_ref[0] = (upflat_ref[...] * xflat_ref[0]).astype(out_ref.dtype)


# ------------------------------ JAX glue -------------------------------------
def _upsample_matrix(out_size, in_size):
    """Row-interpolation matrix matching PyTorch bilinear, align_corners=False."""
    dst = jnp.arange(out_size, dtype=jnp.float32)
    src = jnp.maximum((dst + 0.5) * (in_size / out_size) - 0.5, 0.0)
    i0 = jnp.clip(jnp.floor(src).astype(jnp.int32), 0, in_size - 1)
    i1 = jnp.minimum(i0 + 1, in_size - 1)
    l1 = src - i0.astype(jnp.float32)
    l0 = 1.0 - l1
    rows = jnp.arange(out_size)
    m = jnp.zeros((out_size, in_size), jnp.float32)
    m = m.at[rows, i0].add(l0)
    m = m.at[rows, i1].add(l1)
    return m


def _im2col_3x3_s2(x):
    """x: (N, C, H, W) -> (N, C*9, (H//2)*(W//2)); rows ordered (c, kh, kw)."""
    n, c, h, w = x.shape
    ho, wo = h // 2, w // 2
    xp = jnp.pad(x, ((0, 0), (0, 0), (1, 1), (1, 1)))
    taps = []
    for kh in range(3):
        for kw in range(3):
            taps.append(xp[:, :, kh:kh + 2 * ho:2, kw:kw + 2 * wo:2])  # (N,C,Ho,Wo)
    col = jnp.stack(taps, axis=2)             # (N, C, 9, Ho, Wo), tap = kh*3+kw
    return col.reshape(n, c * 9, ho * wo)     # row index = c*9 + kh*3 + kw


def attention_gate_forward(g, x, params):
    """g: (N, Cg, Hg, Wg), x: (N, Cx, Hx, Wx), NCHW.  Returns (N, Cx, Hx, Wx)."""
    n, cg, hg, wg_sp = g.shape
    _, cx, hx, wx_sp = x.shape
    sg = hg * wg_sp
    sx = hx * wx_sp

    wgt_g, b_g, wgt_x, b_x, wgt_a, b_a = (
        params[k] for k in ("wg", "bg", "wx", "bx", "wa", "ba"))

    # Layout plumbing only -- no transposes needed for this layout.
    g_mat = g.reshape(n, cg, sg)                       # (N, Cg, Sg)
    xcol = _im2col_3x3_s2(x)                           # (N, Cx*9, Sg)
    xflat = x.reshape(n, cx, sx)                       # (N, Cx, Sx)

    uh = _upsample_matrix(hx, hg)                      # (Hx, Hg)
    uwt = _upsample_matrix(wx_sp, wg_sp).T             # (Wg, Wx)

    wg_m = wgt_g.reshape(cx, cg)                       # (Cx, Cg)
    wx_m = wgt_x.reshape(cx, cx * 9)                   # (Cx, Cx*9)
    wa_m = wgt_a.reshape(1, cx)                        # (1, Cx)
    b_gx = (b_g + b_x).reshape(cx, 1)                  # folded conv biases
    ba_s = b_a.reshape(1, 1)                           # scalar, goes to SMEM

    kernel = functools.partial(attention_gate_kernel,
                               n_hg=hg, n_wg=wg_sp, n_hx=hx, n_wx=wx_sp)

    out_flat = pl.pallas_call(
        kernel,
        out_shape=jax.ShapeDtypeStruct((n, cx, sx), x.dtype),
        grid_spec=pltpu.PrefetchScalarGridSpec(
            num_scalar_prefetch=0,
            grid=(n,),
            in_specs=[
                pl.BlockSpec((1, cg, sg), lambda b: (b, 0, 0)),
                pl.BlockSpec((1, cx * 9, sg), lambda b: (b, 0, 0)),
                pl.BlockSpec((1, cx, sx), lambda b: (b, 0, 0)),
                pl.BlockSpec((cx, cg), lambda b: (0, 0)),
                pl.BlockSpec((cx, cx * 9), lambda b: (0, 0)),
                pl.BlockSpec((1, cx), lambda b: (0, 0)),
                pl.BlockSpec((cx, 1), lambda b: (0, 0)),
                pl.BlockSpec((1, 1), lambda b: (0, 0),
                             memory_space=pltpu.MemorySpace.SMEM),
                pl.BlockSpec((hx, hg), lambda b: (0, 0)),
                pl.BlockSpec((wg_sp, wx_sp), lambda b: (0, 0)),
            ],
            out_specs=pl.BlockSpec((1, cx, sx), lambda b: (b, 0, 0)),
            scratch_shapes=[
                pltpu.VMEM((hg, wg_sp), jnp.float32),   # att2d
                pltpu.VMEM((1, sx), jnp.float32),       # flattened upsampled gate
            ],
        ),
        compiler_params=pltpu.CompilerParams(dimension_semantics=("parallel",)),
    )(g_mat, xcol, xflat, wg_m, wx_m, wa_m, b_gx, ba_s, uh, uwt)

    return out_flat.reshape(n, cx, hx, wx_sp)


# ------------------------- pure-JAX reference --------------------------------
def attention_gate_ref(g, x, params):
    wgt_g, b_g, wgt_x, b_x, wgt_a, b_a = (
        params[k] for k in ("wg", "bg", "wx", "bx", "wa", "ba"))
    dn = ("NCHW", "OIHW", "NCHW")
    g_feat = jax.lax.conv_general_dilated(g, wgt_g, (1, 1), "VALID",
                                          dimension_numbers=dn) + b_g.reshape(1, -1, 1, 1)
    x_feat = jax.lax.conv_general_dilated(x, wgt_x, (2, 2), ((1, 1), (1, 1)),
                                          dimension_numbers=dn) + b_x.reshape(1, -1, 1, 1)
    fsum = jax.nn.relu(g_feat + x_feat)
    att = jax.lax.conv_general_dilated(fsum, wgt_a, (1, 1), "VALID",
                                       dimension_numbers=dn) + b_a.reshape(1, 1, 1, 1)
    att = jax.nn.sigmoid(att)
    _, _, hg, wg_sp = att.shape
    uh = _upsample_matrix(2 * hg, hg)
    uw = _upsample_matrix(2 * wg_sp, wg_sp)
    up = jnp.einsum("oh,nchw,pw->ncop", uh, att, uw)
    return up * x


# --------------------------------- main ---------------------------------------
if __name__ == "__main__":
    key = jax.random.PRNGKey(0)
    N, Cg, Cx = 2, 8, 4
    Hx = Wx = 16        # skip-connection (x) spatial size
    Hg = Wg = 8         # gating signal (g) spatial size = Hx // 2

    ks = jax.random.split(key, 8)
    g_in = jax.random.normal(ks[0], (N, Cg, Hg, Wg), jnp.float32)
    x_in = jax.random.normal(ks[1], (N, Cx, Hx, Wx), jnp.float32)

    # deterministic synthetic parameters (shapes from nn.Conv2d in __init__)
    params = dict(
        wg=0.2 * jax.random.normal(ks[2], (Cx, Cg, 1, 1), jnp.float32),
        bg=0.1 * jax.random.normal(ks[3], (Cx,), jnp.float32),
        wx=0.2 * jax.random.normal(ks[4], (Cx, Cx, 3, 3), jnp.float32),
        bx=0.1 * jax.random.normal(ks[5], (Cx,), jnp.float32),
        wa=0.2 * jax.random.normal(ks[6], (1, Cx, 1, 1), jnp.float32),
        ba=0.1 * jax.random.normal(ks[7], (1,), jnp.float32),
    )

    out = attention_gate_forward(g_in, x_in, params)
    jax.block_until_ready(out)

    ref = attention_gate_ref(g_in, x_in, params)
    assert out.shape == x_in.shape, (out.shape, x_in.shape)
    max_err = float(jnp.max(jnp.abs(out - ref)))
    if not jnp.allclose(out, ref, atol=1e-4, rtol=1e-4):
        raise AssertionError(f"Pallas result mismatch vs reference, max err {max_err}")
    print("KERNEL_OK")
</pallas_src>

<mosaic_0001>
module attributes {stable_mosaic.version = 11 : i64} {
  func.func @attention_gate_kernel(%arg0: i32, %arg1: memref<1x8x64xf32, #tpu.memory_space<vmem>>, %arg2: memref<1x36x64xf32, #tpu.memory_space<vmem>>, %arg3: memref<1x4x256xf32, #tpu.memory_space<vmem>>, %arg4: memref<4x8xf32, #tpu.memory_space<vmem>>, %arg5: memref<4x36xf32, #tpu.memory_space<vmem>>, %arg6: memref<1x4xf32, #tpu.memory_space<vmem>>, %arg7: memref<4x1xf32, #tpu.memory_space<vmem>>, %arg8: memref<1x1xf32, #tpu.memory_space<smem>>, %arg9: memref<16x8xf32, #tpu.memory_space<vmem>>, %arg10: memref<8x16xf32, #tpu.memory_space<vmem>>, %arg11: memref<1x4x256xf32, #tpu.memory_space<vmem>>, %arg12: memref<8x8xf32, #tpu.memory_space<vmem>>, %arg13: memref<1x256xf32, #tpu.memory_space<vmem>>) attributes {dimension_semantics = [#tpu.dimension_semantics<parallel>], iteration_bounds = array<i64: 2>, scalar_prefetch = 0 : i64, scratch_operands = 2 : i64, tpu.core_type = #tpu.core_type<tc>, window_params = [{transform_indices = @transform_0, window_bounds = array<i64: 1, 8, 64>}, {transform_indices = @transform_1, window_bounds = array<i64: 1, 36, 64>}, {transform_indices = @transform_2, window_bounds = array<i64: 1, 4, 256>}, {pipeline_mode = #tpu.pipeline_mode<synchronous>, transform_indices = @transform_3, window_bounds = array<i64: 4, 8>}, {pipeline_mode = #tpu.pipeline_mode<synchronous>, transform_indices = @transform_4, window_bounds = array<i64: 4, 36>}, {pipeline_mode = #tpu.pipeline_mode<synchronous>, transform_indices = @transform_5, window_bounds = array<i64: 1, 4>}, {pipeline_mode = #tpu.pipeline_mode<synchronous>, transform_indices = @transform_6, window_bounds = array<i64: 4, 1>}, {transform_indices = @transform_7, window_bounds = array<i64: 1, 1>}, {pipeline_mode = #tpu.pipeline_mode<synchronous>, transform_indices = @transform_8, window_bounds = array<i64: 16, 8>}, {pipeline_mode = #tpu.pipeline_mode<synchronous>, transform_indices = @transform_9, window_bounds = array<i64: 8, 16>}, {transform_indices = @transform_10, window_bounds = array<i64: 1, 4, 256>}]} {
    %c0 = arith.constant 0 : index
    %c0_0 = arith.constant 0 : index
    %0 = vector.load %arg4[%c0, %c0_0] : memref<4x8xf32, #tpu.memory_space<vmem>>, vector<4x8xf32>
    %c0_1 = arith.constant 0 : index
    %c0_2 = arith.constant 0 : index
    %c0_3 = arith.constant 0 : index
    %1 = vector.load %arg1[%c0_1, %c0_2, %c0_3] : memref<1x8x64xf32, #tpu.memory_space<vmem>>, vector<1x8x64xf32>
    %2 = vector.shape_cast %1 : vector<1x8x64xf32> to vector<8x64xf32>
    %cst = arith.constant dense<0.000000e+00> : vector<4x64xf32>
    %3 = tpu.matmul %0, %2, %cst {dimension_numbers = #tpu.dot_dimension_numbers<[1], [0], [0], [1], [0, 0, 1, 1], [], []>} : vector<4x8xf32>, vector<8x64xf32>, vector<4x64xf32> -> vector<4x64xf32>
    %c0_4 = arith.constant 0 : index
    %c0_5 = arith.constant 0 : index
    %4 = vector.load %arg5[%c0_4, %c0_5] : memref<4x36xf32, #tpu.memory_space<vmem>>, vector<4x36xf32>
    %c0_6 = arith.constant 0 : index
    %c0_7 = arith.constant 0 : index
    %c0_8 = arith.constant 0 : index
    %5 = vector.load %arg2[%c0_6, %c0_7, %c0_8] : memref<1x36x64xf32, #tpu.memory_space<vmem>>, vector<1x36x64xf32>
    %6 = vector.shape_cast %5 : vector<1x36x64xf32> to vector<36x64xf32>
    %cst_9 = arith.constant dense<0.000000e+00> : vector<4x64xf32>
    %7 = tpu.matmul %4, %6, %cst_9 {dimension_numbers = #tpu.dot_dimension_numbers<[1], [0], [0], [1], [0, 0, 1, 1], [], []>} : vector<4x36xf32>, vector<36x64xf32>, vector<4x64xf32> -> vector<4x64xf32>
    %8 = arith.addf %3, %7 : vector<4x64xf32>
    %c0_10 = arith.constant 0 : index
    %c0_11 = arith.constant 0 : index
    %9 = vector.load %arg7[%c0_10, %c0_11] : memref<4x1xf32, #tpu.memory_space<vmem>>, vector<4x1xf32>
    %10 = vector.broadcast %9 : vector<4x1xf32> to vector<4x64xf32>
    %11 = arith.addf %8, %10 : vector<4x64xf32>
    %cst_12 = arith.constant 0.000000e+00 : f32
    %12 = vector.broadcast %cst_12 : f32 to vector<4x64xf32>
    %13 = arith.maximumf %11, %12 : vector<4x64xf32>
    %c0_13 = arith.constant 0 : index
    %c0_14 = arith.constant 0 : index
    %14 = vector.load %arg6[%c0_13, %c0_14] : memref<1x4xf32, #tpu.memory_space<vmem>>, vector<1x4xf32>
    %cst_15 = arith.constant dense<0.000000e+00> : vector<1x64xf32>
    %15 = tpu.matmul %14, %13, %cst_15 {dimension_numbers = #tpu.dot_dimension_numbers<[1], [0], [0], [1], [0, 0, 1, 1], [], []>} : vector<1x4xf32>, vector<4x64xf32>, vector<1x64xf32> -> vector<1x64xf32>
    %c0_16 = arith.constant 0 : index
    %c0_17 = arith.constant 0 : index
    %16 = memref.load %arg8[%c0_16, %c0_17] : memref<1x1xf32, #tpu.memory_space<smem>>
    %17 = vector.broadcast %16 : f32 to vector<1x64xf32>
    %18 = arith.addf %15, %17 : vector<1x64xf32>
    %cst_18 = arith.constant 0.000000e+00 : f32
    %19 = vector.broadcast %cst_18 : f32 to vector<1x64xf32>
    %20 = arith.subf %19, %18 : vector<1x64xf32>
    %21 = math.exp %20 : vector<1x64xf32>
    %cst_19 = arith.constant 1.000000e+00 : f32
    %22 = vector.broadcast %cst_19 : f32 to vector<1x64xf32>
    %23 = arith.addf %22, %21 : vector<1x64xf32>
    %cst_20 = arith.constant 1.000000e+00 : f32
    %24 = vector.broadcast %cst_20 : f32 to vector<1x64xf32>
    %25 = arith.divf %24, %23 : vector<1x64xf32>
    %26 = vector.extract_strided_slice %25 {offsets = [0, 0], sizes = [1, 8], strides = [1, 1]} : vector<1x64xf32> to vector<1x8xf32>
    %c0_21 = arith.constant 0 : index
    %c0_22 = arith.constant 0 : index
    %27 = vector.load %arg12[%c0_21, %c0_22] : memref<8x8xf32, #tpu.memory_space<vmem>>, vector<1x8xf32>
    tpu.vector_store %arg12[%c0_21, %c0_22], %26 {strides = array<i32>} : memref<8x8xf32, #tpu.memory_space<vmem>>, vector<1x8xf32>,
    %28 = vector.extract_strided_slice %25 {offsets = [0, 8], sizes = [1, 8], strides = [1, 1]} : vector<1x64xf32> to vector<1x8xf32>
    %c1 = arith.constant 1 : index
    %c0_23 = arith.constant 0 : index
    %29 = vector.load %arg12[%c1, %c0_23] : memref<8x8xf32, #tpu.memory_space<vmem>>, vector<1x8xf32>
    tpu.vector_store %arg12[%c1, %c0_23], %28 {strides = array<i32>} : memref<8x8xf32, #tpu.memory_space<vmem>>, vector<1x8xf32>,
    %30 = vector.extract_strided_slice %25 {offsets = [0, 16], sizes = [1, 8], strides = [1, 1]} : vector<1x64xf32> to vector<1x8xf32>
    %c2 = arith.constant 2 : index
    %c0_24 = arith.constant 0 : index
    %31 = vector.load %arg12[%c2, %c0_24] : memref<8x8xf32, #tpu.memory_space<vmem>>, vector<1x8xf32>
    tpu.vector_store %arg12[%c2, %c0_24], %30 {strides = array<i32>} : memref<8x8xf32, #tpu.memory_space<vmem>>, vector<1x8xf32>,
    %32 = vector.extract_strided_slice %25 {offsets = [0, 24], sizes = [1, 8], strides = [1, 1]} : vector<1x64xf32> to vector<1x8xf32>
    %c3 = arith.constant 3 : index
    %c0_25 = arith.constant 0 : index
    %33 = vector.load %arg12[%c3, %c0_25] : memref<8x8xf32, #tpu.memory_space<vmem>>, vector<1x8xf32>
    tpu.vector_store %arg12[%c3, %c0_25], %32 {strides = array<i32>} : memref<8x8xf32, #tpu.memory_space<vmem>>, vector<1x8xf32>,
    %34 = vector.extract_strided_slice %25 {offsets = [0, 32], sizes = [1, 8], strides = [1, 1]} : vector<1x64xf32> to vector<1x8xf32>
    %c4 = arith.constant 4 : index
    %c0_26 = arith.constant 0 : index
    %35 = vector.load %arg12[%c4, %c0_26] : memref<8x8xf32, #tpu.memory_space<vmem>>, vector<1x8xf32>
    tpu.vector_store %arg12[%c4, %c0_26], %34 {strides = array<i32>} : memref<8x8xf32, #tpu.memory_space<vmem>>, vector<1x8xf32>,
    %36 = vector.extract_strided_slice %25 {offsets = [0, 40], sizes = [1, 8], strides = [1, 1]} : vector<1x64xf32> to vector<1x8xf32>
    %c5 = arith.constant 5 : index
    %c0_27 = arith.constant 0 : index
    %37 = vector.load %arg12[%c5, %c0_27] : memref<8x8xf32, #tpu.memory_space<vmem>>, vector<1x8xf32>
    tpu.vector_store %arg12[%c5, %c0_27], %36 {strides = array<i32>} : memref<8x8xf32, #tpu.memory_space<vmem>>, vector<1x8xf32>,
    %38 = vector.extract_strided_slice %25 {offsets = [0, 48], sizes = [1, 8], strides = [1, 1]} : vector<1x64xf32> to vector<1x8xf32>
    %c6 = arith.constant 6 : index
    %c0_28 = arith.constant 0 : index
    %39 = vector.load %arg12[%c6, %c0_28] : memref<8x8xf32, #tpu.memory_space<vmem>>, vector<1x8xf32>
    tpu.vector_store %arg12[%c6, %c0_28], %38 {strides = array<i32>} : memref<8x8xf32, #tpu.memory_space<vmem>>, vector<1x8xf32>,
    %40 = vector.extract_strided_slice %25 {offsets = [0, 56], sizes = [1, 8], strides = [1, 1]} : vector<1x64xf32> to vector<1x8xf32>
    %c7 = arith.constant 7 : index
    %c0_29 = arith.constant 0 : index
    %41 = vector.load %arg12[%c7, %c0_29] : memref<8x8xf32, #tpu.memory_space<vmem>>, vector<1x8xf32>
    tpu.vector_store %arg12[%c7, %c0_29], %40 {strides = array<i32>} : memref<8x8xf32, #tpu.memory_space<vmem>>, vector<1x8xf32>,
    %c0_30 = arith.constant 0 : index
    %c0_31 = arith.constant 0 : index
    %42 = vector.load %arg12[%c0_30, %c0_31] : memref<8x8xf32, #tpu.memory_space<vmem>>, vector<8x8xf32>
    %c0_32 = arith.constant 0 : index
    %c0_33 = arith.constant 0 : index
    %43 = vector.load %arg10[%c0_32, %c0_33] : memref<8x16xf32, #tpu.memory_space<vmem>>, vector<8x16xf32>
    %cst_34 = arith.constant dense<0.000000e+00> : vector<8x16xf32>
    %44 = tpu.matmul %42, %43, %cst_34 {dimension_numbers = #tpu.dot_dimension_numbers<[1], [0], [0], [1], [0, 0, 1, 1], [], []>} : vector<8x8xf32>, vector<8x16xf32>, vector<8x16xf32> -> vector<8x16xf32>
    %c0_35 = arith.constant 0 : index
    %c0_36 = arith.constant 0 : index
    %45 = vector.load %arg9[%c0_35, %c0_36] : memref<16x8xf32, #tpu.memory_space<vmem>>, vector<16x8xf32>
    %cst_37 = arith.constant dense<0.000000e+00> : vector<16x16xf32>
    %46 = tpu.matmul %45, %44, %cst_37 {dimension_numbers = #tpu.dot_dimension_numbers<[1], [0], [0], [1], [0, 0, 1, 1], [], []>} : vector<16x8xf32>, vector<8x16xf32>, vector<16x16xf32> -> vector<16x16xf32>
    %47 = vector.extract_strided_slice %46 {offsets = [0, 0], sizes = [1, 16], strides = [1, 1]} : vector<16x16xf32> to vector<1x16xf32>
    %c0_38 = arith.constant 0 : index
    %c0_39 = arith.constant 0 : index
    %48 = vector.load %arg13[%c0_38, %c0_39] : memref<1x256xf32, #tpu.memory_space<vmem>>, vector<1x16xf32>
    tpu.vector_store %arg13[%c0_38, %c0_39], %47 {strides = array<i32>} : memref<1x256xf32, #tpu.memory_space<vmem>>, vector<1x16xf32>,
    %49 = vector.extract_strided_slice %46 {offsets = [1, 0], sizes = [1, 16], strides = [1, 1]} : vector<16x16xf32> to vector<1x16xf32>
    %c0_40 = arith.constant 0 : index
    %c16 = arith.constant 16 : index
    %50 = vector.load %arg13[%c0_40, %c16] : memref<1x256xf32, #tpu.memory_space<vmem>>, vector<1x16xf32>
    tpu.vector_store %arg13[%c0_40, %c16], %49 {strides = array<i32>} : memref<1x256xf32, #tpu.memory_space<vmem>>, vector<1x16xf32>,
    %51 = vector.extract_strided_slice %46 {offsets = [2, 0], sizes = [1, 16], strides = [1, 1]} : vector<16x16xf32> to vector<1x16xf32>
    %c0_41 = arith.constant 0 : index
    %c32 = arith.constant 32 : index
    %52 = vector.load %arg13[%c0_41, %c32] : memref<1x256xf32, #tpu.memory_space<vmem>>, vector<1x16xf32>
    tpu.vector_store %arg13[%c0_41, %c32], %51 {strides = array<i32>} : memref<1x256xf32, #tpu.memory_space<vmem>>, vector<1x16xf32>,
    %53 = vector.extract_strided_slice %46 {offsets = [3, 0], sizes = [1, 16], strides = [1, 1]} : vector<16x16xf32> to vector<1x16xf32>
    %c0_42 = arith.constant 0 : index
    %c48 = arith.constant 48 : index
    %54 = vector.load %arg13[%c0_42, %c48] : memref<1x256xf32, #tpu.memory_space<vmem>>, vector<1x16xf32>
    tpu.vector_store %arg13[%c0_42, %c48], %53 {strides = array<i32>} : memref<1x256xf32, #tpu.memory_space<vmem>>, vector<1x16xf32>,
    %55 = vector.extract_strided_slice %46 {offsets = [4, 0], sizes = [1, 16], strides = [1, 1]} : vector<16x16xf32> to vector<1x16xf32>
    %c0_43 = arith.constant 0 : index
    %c64 = arith.constant 64 : index
    %56 = vector.load %arg13[%c0_43, %c64] : memref<1x256xf32, #tpu.memory_space<vmem>>, vector<1x16xf32>
    tpu.vector_store %arg13[%c0_43, %c64], %55 {strides = array<i32>} : memref<1x256xf32, #tpu.memory_space<vmem>>, vector<1x16xf32>,
    %57 = vector.extract_strided_slice %46 {offsets = [5, 0], sizes = [1, 16], strides = [1, 1]} : vector<16x16xf32> to vector<1x16xf32>
    %c0_44 = arith.constant 0 : index
    %c80 = arith.constant 80 : index
    %58 = vector.load %arg13[%c0_44, %c80] : memref<1x256xf32, #tpu.memory_space<vmem>>, vector<1x16xf32>
    tpu.vector_store %arg13[%c0_44, %c80], %57 {strides = array<i32>} : memref<1x256xf32, #tpu.memory_space<vmem>>, vector<1x16xf32>,
    %59 = vector.extract_strided_slice %46 {offsets = [6, 0], sizes = [1, 16], strides = [1, 1]} : vector<16x16xf32> to vector<1x16xf32>
    %c0_45 = arith.constant 0 : index
    %c96 = arith.constant 96 : index
    %60 = vector.load %arg13[%c0_45, %c96] : memref<1x256xf32, #tpu.memory_space<vmem>>, vector<1x16xf32>
    tpu.vector_store %arg13[%c0_45, %c96], %59 {strides = array<i32>} : memref<1x256xf32, #tpu.memory_space<vmem>>, vector<1x16xf32>,
    %61 = vector.extract_strided_slice %46 {offsets = [7, 0], sizes = [1, 16], strides = [1, 1]} : vector<16x16xf32> to vector<1x16xf32>
    %c0_46 = arith.constant 0 : index
    %c112 = arith.constant 112 : index
    %62 = vector.load %arg13[%c0_46, %c112] : memref<1x256xf32, #tpu.memory_space<vmem>>, vector<1x16xf32>
    tpu.vector_store %arg13[%c0_46, %c112], %61 {strides = array<i32>} : memref<1x256xf32, #tpu.memory_space<vmem>>, vector<1x16xf32>,
    %63 = vector.extract_strided_slice %46 {offsets = [8, 0], sizes = [1, 16], strides = [1, 1]} : vector<16x16xf32> to vector<1x16xf32>
    %c0_47 = arith.constant 0 : index
    %c128 = arith.constant 128 : index
    %64 = vector.load %arg13[%c0_47, %c128] : memref<1x256xf32, #tpu.memory_space<vmem>>, vector<1x16xf32>
    tpu.vector_store %arg13[%c0_47, %c128], %63 {strides = array<i32>} : memref<1x256xf32, #tpu.memory_space<vmem>>, vector<1x16xf32>,
    %65 = vector.extract_strided_slice %46 {offsets = [9, 0], sizes = [1, 16], strides = [1, 1]} : vector<16x16xf32> to vector<1x16xf32>
    %c0_48 = arith.constant 0 : index
    %c144 = arith.constant 144 : index
    %66 = vector.load %arg13[%c0_48, %c144] : memref<1x256xf32, #tpu.memory_space<vmem>>, vector<1x16xf32>
    tpu.vector_store %arg13[%c0_48, %c144], %65 {strides = array<i32>} : memref<1x256xf32, #tpu.memory_space<vmem>>, vector<1x16xf32>,
    %67 = vector.extract_strided_slice %46 {offsets = [10, 0], sizes = [1, 16], strides = [1, 1]} : vector<16x16xf32> to vector<1x16xf32>
    %c0_49 = arith.constant 0 : index
    %c160 = arith.constant 160 : index
    %68 = vector.load %arg13[%c0_49, %c160] : memref<1x256xf32, #tpu.memory_space<vmem>>, vector<1x16xf32>
    tpu.vector_store %arg13[%c0_49, %c160], %67 {strides = array<i32>} : memref<1x256xf32, #tpu.memory_space<vmem>>, vector<1x16xf32>,
    %69 = vector.extract_strided_slice %46 {offsets = [11, 0], sizes = [1, 16], strides = [1, 1]} : vector<16x16xf32> to vector<1x16xf32>
    %c0_50 = arith.constant 0 : index
    %c176 = arith.constant 176 : index
    %70 = vector.load %arg13[%c0_50, %c176] : memref<1x256xf32, #tpu.memory_space<vmem>>, vector<1x16xf32>
    tpu.vector_store %arg13[%c0_50, %c176], %69 {strides = array<i32>} : memref<1x256xf32, #tpu.memory_space<vmem>>, vector<1x16xf32>,
    %71 = vector.extract_strided_slice %46 {offsets = [12, 0], sizes = [1, 16], strides = [1, 1]} : vector<16x16xf32> to vector<1x16xf32>
    %c0_51 = arith.constant 0 : index
    %c192 = arith.constant 192 : index
    %72 = vector.load %arg13[%c0_51, %c192] : memref<1x256xf32, #tpu.memory_space<vmem>>, vector<1x16xf32>
    tpu.vector_store %arg13[%c0_51, %c192], %71 {strides = array<i32>} : memref<1x256xf32, #tpu.memory_space<vmem>>, vector<1x16xf32>,
    %73 = vector.extract_strided_slice %46 {offsets = [13, 0], sizes = [1, 16], strides = [1, 1]} : vector<16x16xf32> to vector<1x16xf32>
    %c0_52 = arith.constant 0 : index
    %c208 = arith.constant 208 : index
    %74 = vector.load %arg13[%c0_52, %c208] : memref<1x256xf32, #tpu.memory_space<vmem>>, vector<1x16xf32>
    tpu.vector_store %arg13[%c0_52, %c208], %73 {strides = array<i32>} : memref<1x256xf32, #tpu.memory_space<vmem>>, vector<1x16xf32>,
    %75 = vector.extract_strided_slice %46 {offsets = [14, 0], sizes = [1, 16], strides = [1, 1]} : vector<16x16xf32> to vector<1x16xf32>
    %c0_53 = arith.constant 0 : index
    %c224 = arith.constant 224 : index
    %76 = vector.load %arg13[%c0_53, %c224] : memref<1x256xf32, #tpu.memory_space<vmem>>, vector<1x16xf32>
    tpu.vector_store %arg13[%c0_53, %c224], %75 {strides = array<i32>} : memref<1x256xf32, #tpu.memory_space<vmem>>, vector<1x16xf32>,
    %77 = vector.extract_strided_slice %46 {offsets = [15, 0], sizes = [1, 16], strides = [1, 1]} : vector<16x16xf32> to vector<1x16xf32>
    %c0_54 = arith.constant 0 : index
    %c240 = arith.constant 240 : index
    %78 = vector.load %arg13[%c0_54, %c240] : memref<1x256xf32, #tpu.memory_space<vmem>>, vector<1x16xf32>
    tpu.vector_store %arg13[%c0_54, %c240], %77 {strides = array<i32>} : memref<1x256xf32, #tpu.memory_space<vmem>>, vector<1x16xf32>,
    %c0_55 = arith.constant 0 : index
    %c0_56 = arith.constant 0 : index
    %79 = vector.load %arg13[%c0_55, %c0_56] : memref<1x256xf32, #tpu.memory_space<vmem>>, vector<1x256xf32>
    %c0_57 = arith.constant 0 : index
    %c0_58 = arith.constant 0 : index
    %c0_59 = arith.constant 0 : index
    %80 = vector.load %arg3[%c0_57, %c0_58, %c0_59] : memref<1x4x256xf32, #tpu.memory_space<vmem>>, vector<1x4x256xf32>
    %81 = vector.shape_cast %80 : vector<1x4x256xf32> to vector<4x256xf32>
    %82 = vector.broadcast %79 : vector<1x256xf32> to vector<4x256xf32>
    %83 = arith.mulf %82, %81 : vector<4x256xf32>
    %c0_60 = arith.constant 0 : index
    %c0_61 = arith.constant 0 : index
    %c0_62 = arith.constant 0 : index
    %84 = vector.load %arg11[%c0_60, %c0_61, %c0_62] : memref<1x4x256xf32, #tpu.memory_space<vmem>>, vector<1x4x256xf32>
    %85 = vector.shape_cast %84 : vector<1x4x256xf32> to vector<4x256xf32>
    %86 = vector.shape_cast %83 : vector<4x256xf32> to vector<1x4x256xf32>
    tpu.vector_store %arg11[%c0_60, %c0_61, %c0_62], %86 {strides = array<i32>} : memref<1x4x256xf32, #tpu.memory_space<vmem>>, vector<1x4x256xf32>,
    return
  }
  func.func @transform_0(%arg0: i32) -> (i32, i32, i32) {
    %c0_i32 = arith.constant 0 : i32
    %c0_i32_0 = arith.constant 0 : i32
    %c0_i32_1 = arith.constant 0 : i32
    return %arg0, %c0_i32, %c0_i32_0 : i32, i32, i32
  }
  func.func @transform_1(%arg0: i32) -> (i32, i32, i32) {
    %c0_i32 = arith.constant 0 : i32
    %c0_i32_0 = arith.constant 0 : i32
    %c0_i32_1 = arith.constant 0 : i32
    return %arg0, %c0_i32, %c0_i32_0 : i32, i32, i32
  }
  func.func @transform_2(%arg0: i32) -> (i32, i32, i32) {
    %c0_i32 = arith.constant 0 : i32
    %c0_i32_0 = arith.constant 0 : i32
    %c0_i32_1 = arith.constant 0 : i32
    return %arg0, %c0_i32, %c0_i32_0 : i32, i32, i32
  }
  func.func @transform_3(%arg0: i32) -> (i32, i32) {
    %c0_i32 = arith.constant 0 : i32
    %c0_i32_0 = arith.constant 0 : i32
    %c0_i32_1 = arith.constant 0 : i32
    return %c0_i32, %c0_i32_0 : i32, i32
  }
  func.func @transform_4(%arg0: i32) -> (i32, i32) {
    %c0_i32 = arith.constant 0 : i32
    %c0_i32_0 = arith.constant 0 : i32
    %c0_i32_1 = arith.constant 0 : i32
    return %c0_i32, %c0_i32_0 : i32, i32
  }
  func.func @transform_5(%arg0: i32) -> (i32, i32) {
    %c0_i32 = arith.constant 0 : i32
    %c0_i32_0 = arith.constant 0 : i32
    %c0_i32_1 = arith.constant 0 : i32
    return %c0_i32, %c0_i32_0 : i32, i32
  }
  func.func @transform_6(%arg0: i32) -> (i32, i32) {
    %c0_i32 = arith.constant 0 : i32
    %c0_i32_0 = arith.constant 0 : i32
    %c0_i32_1 = arith.constant 0 : i32
    return %c0_i32, %c0_i32_0 : i32, i32
  }
  func.func @transform_7(%arg0: i32) -> (i32, i32) {
    %c0_i32 = arith.constant 0 : i32
    %c0_i32_0 = arith.constant 0 : i32
    %c0_i32_1 = arith.constant 0 : i32
    return %c0_i32, %c0_i32_0 : i32, i32
  }
  func.func @transform_8(%arg0: i32) -> (i32, i32) {
    %c0_i32 = arith.constant 0 : i32
    %c0_i32_0 = arith.constant 0 : i32
    %c0_i32_1 = arith.constant 0 : i32
    return %c0_i32, %c0_i32_0 : i32, i32
  }
  func.func @transform_9(%arg0: i32) -> (i32, i32) {
    %c0_i32 = arith.constant 0 : i32
    %c0_i32_0 = arith.constant 0 : i32
    %c0_i32_1 = arith.constant 0 : i32
    return %c0_i32, %c0_i32_0 : i32, i32
  }
  func.func @transform_10(%arg0: i32) -> (i32, i32, i32) {
    %c0_i32 = arith.constant 0 : i32
    %c0_i32_0 = arith.constant 0 : i32
    %c0_i32_1 = arith.constant 0 : i32
    return %arg0, %c0_i32, %c0_i32_0 : i32, i32, i32
  }
}

</mosaic_0001>

<llo_original>
// kernel: tpu_custom_call.1
$region0: #{tpu_custom_call.1}
  #allocation0 [shape = 'u32[]', space=smem, size = 0x4, offset = 0x4, fixed_abs, tag = 'smem constant byte address 0x4 - core index']
  #allocation1 [shape = 'u32[144,128]{1,0:T(1,128)}', space=vmem, size = 0x12000, scoped, tag = 'internal scratch']
  #allocation2 [shape = 'f32[8,8]{1,0:T(8,128)}', space=vmem, size = 0x1000, scoped, tag = 'scratch operand']
  #allocation3 [shape = 'f32[1,256]{1,0:T(1,128)}', space=vmem, size = 0x400, scoped, tag = 'scratch operand']
  #allocation4 [shape = 'f32[1,1]{1,0:T(1,128)S(6)}', space=smem, size = 0x200, scoped, tag = 'scoped memory for tpu_custom_call.1']
  %s0 = inlined_call_operand.vmem [shape: f32[2,8,64], index: 0, kind: input, shape index: {}]
  %s1 = inlined_call_operand.vmem [shape: f32[2,36,64], index: 1, kind: input, shape index: {}]
  %s2 = inlined_call_operand.vmem [shape: f32[2,4,256], index: 2, kind: input, shape index: {}]
  %s3 = inlined_call_operand.vmem [shape: f32[4,8], index: 3, kind: input, shape index: {}]
  %s4 = inlined_call_operand.vmem [shape: f32[4,36], index: 4, kind: input, shape index: {}]
  %s5 = inlined_call_operand.vmem [shape: f32[1,4], index: 5, kind: input, shape index: {}]
  %s6 = inlined_call_operand.vmem [shape: f32[4,1], index: 6, kind: input, shape index: {}]
  %s7 = inlined_call_operand.<no memory space> [shape: f32[1,1], index: 7, kind: input, shape index: {}]
  %s8 = inlined_call_operand.vmem [shape: f32[16,8], index: 8, kind: input, shape index: {}]
  %s9 = inlined_call_operand.vmem [shape: f32[8,16], index: 9, kind: input, shape index: {}]
  %s10 = inlined_call_operand.hbm [shape: f32[2,4,256], index: 10, kind: output, shape index: {}]
  %s11 = sld [smem:[#allocation0]]
  $region73: #{tpu_custom_call.1} parent=0
    _
  %s13 = ssub.s32 1, %s11
  %s14 = scalar_select 0, %s13, %s11
  %15 = sst [smem:[#allocation4]] %s7
  $region1: #{tpu_custom_call.1} parent=0
    #allocation5 [shape = 'u8[8192]{0}', space=vmem, size = 0x2000, scoped, tag = 'output window, operand 0']
    #allocation6 [shape = 's32[2]{0}', space=sflag, size = 0x8, scoped, tag = 'scoped memory for tpu_custom_call.1']
    %16 = vsyncpa [#allocation6], 0
    %s17 = scalar_lea.sflag [#allocation6], 1
    %18 = vsyncpa %s17, 0
    loop: start=0, step=1, limit=4
    $region2: #{tpu_custom_call.1} parent=1 // loop_pre_header
      _
    $region3: #{tpu_custom_call.1} parent=1 // loop_header
      %s20 = sphi 0, %s24
      %p21 = scmp.ge.s32.totalorder %s20, 4
      %s30 = sphi 0, %s32
      %s33 = sphi 0, %s30
      %s34 = sphi 0, %s33
      %s50 = sphi 0, %s34
      %s56 = sphi 0, %s58
      %s59 = sphi 0, %s56
      %s60 = sphi 0, %s59
      %s76 = sphi 0, %s60
      %s82 = sphi 0, %s84
      %s85 = sphi 0, %s82
      %s86 = sphi 0, %s85
      %s102 = sphi 0, %s86
      %s106 = sphi 0, %s106
      %s108 = sphi 0, %s106
      %s109 = sphi 0, %s108
      %s123 = sphi 0, %s109
      %s127 = sphi 0, %s127
      %s129 = sphi 0, %s127
      %s130 = sphi 0, %s129
      %s144 = sphi 0, %s130
      %s148 = sphi 0, %s148
      %s150 = sphi 0, %s148
      %s151 = sphi 0, %s150
      %s165 = sphi 0, %s151
      %s169 = sphi 0, %s169
      %s171 = sphi 0, %s169
      %s172 = sphi 0, %s171
      %s186 = sphi 0, %s172
      %s190 = sphi 0, %s190
      %s192 = sphi 0, %s190
      %s193 = sphi 0, %s192
      %s207 = sphi 0, %s193
      %s211 = sphi 0, %s211
      %s213 = sphi 0, %s211
      %s214 = sphi 0, %s213
      %s228 = sphi 0, %s214
      %s232 = sphi 0, %s232
      %s234 = sphi 0, %s232
      %s235 = sphi 0, %s234
      %s249 = sphi 0, %s235
      %s255 = sphi 0, %s257
      %s258 = sphi 0, %s255
      %s259 = sphi 0, %s258
      %s275 = sphi 0, %s259
    $region4: #{tpu_custom_call.1} parent=1 // loop_header_branch
      %23 = sbr.rel (%p21) target = $region8
    $region5: #{tpu_custom_call.1} parent=1 // loop_body
      %s25 = ssub.s32 %s20, 1
      %s26 = ssub.s32 %s20, 2
      %s27 = sadd.s32 %s20, 1
      %s28 = ssub.s32 %s20, %s27
      %p29 = scmp.eq.s32.totalorder %s28, 0
      %s31 = sadd.s32 %s30, 1
      %s32 = scalar_select %p29, %s30, %s31
      %p35 = pneg %p29
      %p36 = scmp.eq.s32.totalorder %s20, 1
      %p37 = por %p35, %p36
      %p38 = scmp.ne.s32.totalorder %s30, %s33
      %p39 = scmp.eq.s32.totalorder %s20, 0
      %p40 = por %p38, %p39
      %p41 = scmp.ne.s32.totalorder %s30, %s33
      %p42 = scmp.eq.s32.totalorder %s25, 1
      %p43 = por %p41, %p42
      %p44 = scmp.ne.s32.totalorder %s33, %s34
      %p45 = scmp.eq.s32.totalorder %s25, 0
      %p46 = por %p44, %p45
      %p47 = scmp.ne.s32.totalorder %s33, %s34
      %p48 = scmp.eq.s32.totalorder %s26, 1
      %p49 = por %p47, %p48
      %p51 = scmp.ne.s32.totalorder %s34, %s50
      %p52 = scmp.eq.s32.totalorder %s26, 0
      %p53 = por %p51, %p52
      %s54 = ssub.s32 %s20, %s27
      %p55 = scmp.eq.s32.totalorder %s54, 0
      %s57 = sadd.s32 %s56, 1
      %s58 = scalar_select %p55, %s56, %s57
      %p61 = pneg %p55
      %p62 = scmp.eq.s32.totalorder %s20, 1
      %p63 = por %p61, %p62
      %p64 = scmp.ne.s32.totalorder %s56, %s59
      %p65 = scmp.eq.s32.totalorder %s20, 0
      %p66 = por %p64, %p65
      %p67 = scmp.ne.s32.totalorder %s56, %s59
      %p68 = scmp.eq.s32.totalorder %s25, 1
      %p69 = por %p67, %p68
      %p70 = scmp.ne.s32.totalorder %s59, %s60
      %p71 = scmp.eq.s32.totalorder %s25, 0
      %p72 = por %p70, %p71
      %p73 = scmp.ne.s32.totalorder %s59, %s60
      %p74 = scmp.eq.s32.totalorder %s26, 1
      %p75 = por %p73, %p74
      %p77 = scmp.ne.s32.totalorder %s60, %s76
      %p78 = scmp.eq.s32.totalorder %s26, 0
      %p79 = por %p77, %p78
      %s80 = ssub.s32 %s20, %s27
      %p81 = scmp.eq.s32.totalorder %s80, 0
      %s83 = sadd.s32 %s82, 1
      %s84 = scalar_select %p81, %s82, %s83
      %p87 = pneg %p81
      %p88 = scmp.eq.s32.totalorder %s20, 1
      %p89 = por %p87, %p88
      %p90 = scmp.ne.s32.totalorder %s82, %s85
      %p91 = scmp.eq.s32.totalorder %s20, 0
      %p92 = por %p90, %p91
      %p93 = scmp.ne.s32.totalorder %s82, %s85
      %p94 = scmp.eq.s32.totalorder %s25, 1
      %p95 = por %p93, %p94
      %p96 = scmp.ne.s32.totalorder %s85, %s86
      %p97 = scmp.eq.s32.totalorder %s25, 0
      %p98 = por %p96, %p97
      %p99 = scmp.ne.s32.totalorder %s85, %s86
      %p100 = scmp.eq.s32.totalorder %s26, 1
      %p101 = por %p99, %p100
      %p103 = scmp.ne.s32.totalorder %s86, %s102
      %p104 = scmp.eq.s32.totalorder %s26, 0
      %p105 = por %p103, %p104
      %s107 = sadd.s32 %s106, 1
      %p110 = scmp.eq.s32.totalorder %s20, 1
      %p111 = scmp.ne.s32.totalorder %s106, %s108
      %p112 = scmp.eq.s32.totalorder %s20, 0
      %p113 = por %p111, %p112
      %p114 = scmp.ne.s32.totalorder %s106, %s108
      %p115 = scmp.eq.s32.totalorder %s25, 1
      %p116 = por %p114, %p115
      %p117 = scmp.ne.s32.totalorder %s108, %s109
      %p118 = scmp.eq.s32.totalorder %s25, 0
      %p119 = por %p117, %p118
      %p120 = scmp.ne.s32.totalorder %s108, %s109
      %p121 = scmp.eq.s32.totalorder %s26, 1
      %p122 = por %p120, %p121
      %p124 = scmp.ne.s32.totalorder %s109, %s123
      %p125 = scmp.eq.s32.totalorder %s26, 0
      %p126 = por %p124, %p125
      %s128 = sadd.s32 %s127, 1
      %p131 = scmp.eq.s32.totalorder %s20, 1
      %p132 = scmp.ne.s32.totalorder %s127, %s129
      %p133 = scmp.eq.s32.totalorder %s20, 0
      %p134 = por %p132, %p133
      %p135 = scmp.ne.s32.totalorder %s127, %s129
      %p136 = scmp.eq.s32.totalorder %s25, 1
      %p137 = por %p135, %p136
      %p138 = scmp.ne.s32.totalorder %s129, %s130
      %p139 = scmp.eq.s32.totalorder %s25, 0
      %p140 = por %p138, %p139
      %p141 = scmp.ne.s32.totalorder %s129, %s130
      %p142 = scmp.eq.s32.totalorder %s26, 1
      %p143 = por %p141, %p142
      %p145 = scmp.ne.s32.totalorder %s130, %s144
      %p146 = scmp.eq.s32.totalorder %s26, 0
      %p147 = por %p145, %p146
      %s149 = sadd.s32 %s148, 1
      %p152 = scmp.eq.s32.totalorder %s20, 1
      %p153 = scmp.ne.s32.totalorder %s148, %s150
      %p154 = scmp.eq.s32.totalorder %s20, 0
      %p155 = por %p153, %p154
      %p156 = scmp.ne.s32.totalorder %s148, %s150
      %p157 = scmp.eq.s32.totalorder %s25, 1
      %p158 = por %p156, %p157
      %p159 = scmp.ne.s32.totalorder %s150, %s151
      %p160 = scmp.eq.s32.totalorder %s25, 0
      %p161 = por %p159, %p160
      %p162 = scmp.ne.s32.totalorder %s150, %s151
      %p163 = scmp.eq.s32.totalorder %s26, 1
      %p164 = por %p162, %p163
      %p166 = scmp.ne.s32.totalorder %s151, %s165
      %p167 = scmp.eq.s32.totalorder %s26, 0
      %p168 = por %p166, %p167
      %s170 = sadd.s32 %s169, 1
      %p173 = scmp.eq.s32.totalorder %s20, 1
      %p174 = scmp.ne.s32.totalorder %s169, %s171
      %p175 = scmp.eq.s32.totalorder %s20, 0
      %p176 = por %p174, %p175
      %p177 = scmp.ne.s32.totalorder %s169, %s171
      %p178 = scmp.eq.s32.totalorder %s25, 1
      %p179 = por %p177, %p178
      %p180 = scmp.ne.s32.totalorder %s171, %s172
      %p181 = scmp.eq.s32.totalorder %s25, 0
      %p182 = por %p180, %p181
      %p183 = scmp.ne.s32.totalorder %s171, %s172
      %p184 = scmp.eq.s32.totalorder %s26, 1
      %p185 = por %p183, %p184
      %p187 = scmp.ne.s32.totalorder %s172, %s186
      %p188 = scmp.eq.s32.totalorder %s26, 0
      %p189 = por %p187, %p188
      %s191 = sadd.s32 %s190, 1
      %p194 = scmp.eq.s32.totalorder %s20, 1
      %p195 = scmp.ne.s32.totalorder %s190, %s192
      %p196 = scmp.eq.s32.totalorder %s20, 0
      %p197 = por %p195, %p196
      %p198 = scmp.ne.s32.totalorder %s190, %s192
      %p199 = scmp.eq.s32.totalorder %s25, 1
      %p200 = por %p198, %p199
      %p201 = scmp.ne.s32.totalorder %s192, %s193
      %p202 = scmp.eq.s32.totalorder %s25, 0
      %p203 = por %p201, %p202
      %p204 = scmp.ne.s32.totalorder %s192, %s193
      %p205 = scmp.eq.s32.totalorder %s26, 1
      %p206 = por %p204, %p205
      %p208 = scmp.ne.s32.totalorder %s193, %s207
      %p209 = scmp.eq.s32.totalorder %s26, 0
      %p210 = por %p208, %p209
      %s212 = sadd.s32 %s211, 1
      %p215 = scmp.eq.s32.totalorder %s20, 1
      %p216 = scmp.ne.s32.totalorder %s211, %s213
      %p217 = scmp.eq.s32.totalorder %s20, 0
      %p218 = por %p216, %p217
      %p219 = scmp.ne.s32.totalorder %s211, %s213
      %p220 = scmp.eq.s32.totalorder %s25, 1
      %p221 = por %p219, %p220
      %p222 = scmp.ne.s32.totalorder %s213, %s214
      %p223 = scmp.eq.s32.totalorder %s25, 0
      %p224 = por %p222, %p223
      %p225 = scmp.ne.s32.totalorder %s213, %s214
      %p226 = scmp.eq.s32.totalorder %s26, 1
      %p227 = por %p225, %p226
      %p229 = scmp.ne.s32.totalorder %s214, %s228
      %p230 = scmp.eq.s32.totalorder %s26, 0
      %p231 = por %p229, %p230
      %s233 = sadd.s32 %s232, 1
      %p236 = scmp.eq.s32.totalorder %s20, 1
      %p237 = scmp.ne.s32.totalorder %s232, %s234
      %p238 = scmp.eq.s32.totalorder %s20, 0
      %p239 = por %p237, %p238
      %p240 = scmp.ne.s32.totalorder %s232, %s234
      %p241 = scmp.eq.s32.totalorder %s25, 1
      %p242 = por %p240, %p241
      %p243 = scmp.ne.s32.totalorder %s234, %s235
      %p244 = scmp.eq.s32.totalorder %s25, 0
      %p245 = por %p243, %p244
      %p246 = scmp.ne.s32.totalorder %s234, %s235
      %p247 = scmp.eq.s32.totalorder %s26, 1
      %p248 = por %p246, %p247
      %p250 = scmp.ne.s32.totalorder %s235, %s249
      %p251 = scmp.eq.s32.totalorder %s26, 0
      %p252 = por %p250, %p251
      %s253 = ssub.s32 %s20, %s27
      %p254 = scmp.eq.s32.totalorder %s253, 0
      %s256 = sadd.s32 %s255, 1
      %s257 = scalar_select %p254, %s255, %s256
      %p260 = pneg %p254
      %p261 = scmp.eq.s32.totalorder %s20, 1
      %p262 = por %p260, %p261
      %p263 = scmp.ne.s32.totalorder %s255, %s258
      %p264 = scmp.eq.s32.totalorder %s20, 0
      %p265 = por %p263, %p264
      %p266 = scmp.ne.s32.totalorder %s255, %s258
      %p267 = scmp.eq.s32.totalorder %s25, 1
      %p268 = por %p266, %p267
      %p269 = scmp.ne.s32.totalorder %s258, %s259
      %p270 = scmp.eq.s32.totalorder %s25, 0
      %p271 = por %p269, %p270
      %p272 = scmp.ne.s32.totalorder %s258, %s259
      %p273 = scmp.eq.s32.totalorder %s26, 1
      %p274 = por %p272, %p273
      %p276 = scmp.ne.s32.totalorder %s259, %s275
      %p277 = scmp.eq.s32.totalorder %s26, 0
      %p278 = por %p276, %p277
      %p279 = scmp.le.s32.totalorder 1, %s20
      %p280 = scmp.lt.s32.totalorder %s20, 3
      %p281 = pnand %p279, %p280
      %p282 = pneg %p281
      // Predicated region
      $region9: #{tpu_custom_call.1} parent=5 // pred_check
        _
      $region10: #{tpu_custom_call.1} parent=5 // pred_check_branch
        %284 = sbr.rel (%p281) target = $region12
      $region11: #{tpu_custom_call.1} parent=5 // pred_region
        %s285 = ssub.s32 %s20, 1
        // Predicated region
        $region13: #{tpu_custom_call.1} parent=11 // pred_check
          %p286 = pneg %p119
        $region14: #{tpu_custom_call.1} parent=11 // pred_check_branch
          %288 = sbr.rel (%p286) target = $region16
        $region15: #{tpu_custom_call.1} parent=11 // pred_region
          _
        $region16: #{tpu_custom_call.1} parent=11 // pred_fallthru
          _
        // Predicated region
        $region17: #{tpu_custom_call.1} parent=11 // pred_check
          %p289 = pneg %p140
        $region18: #{tpu_custom_call.1} parent=11 // pred_check_branch
          %291 = sbr.rel (%p289) target = $region20
        $region19: #{tpu_custom_call.1} parent=11 // pred_region
          _
        $region20: #{tpu_custom_call.1} parent=11 // pred_fallthru
          _
        // Predicated region
        $region21: #{tpu_custom_call.1} parent=11 // pred_check
          %p292 = pneg %p161
        $region22: #{tpu_custom_call.1} parent=11 // pred_check_branch
          %294 = sbr.rel (%p292) target = $region24
        $region23: #{tpu_custom_call.1} parent=11 // pred_region
          _
        $region24: #{tpu_custom_call.1} parent=11 // pred_fallthru
          _
        // Predicated region
        $region25: #{tpu_custom_call.1} parent=11 // pred_check
          %p295 = pneg %p182
        $region26: #{tpu_custom_call.1} parent=11 // pred_check_branch
          %297 = sbr.rel (%p295) target = $region28
        $region27: #{tpu_custom_call.1} parent=11 // pred_region
          _
        $region28: #{tpu_custom_call.1} parent=11 // pred_fallthru
          _
        // Predicated region
        $region29: #{tpu_custom_call.1} parent=11 // pred_check
          %p298 = pneg %p203
        $region30: #{tpu_custom_call.1} parent=11 // pred_check_branch
          %300 = sbr.rel (%p298) target = $region32
        $region31: #{tpu_custom_call.1} parent=11 // pred_region
          _
        $region32: #{tpu_custom_call.1} parent=11 // pred_fallthru
          _
        // Predicated region
        $region33: #{tpu_custom_call.1} parent=11 // pred_check
          %p301 = pneg %p224
        $region34: #{tpu_custom_call.1} parent=11 // pred_check_branch
          %303 = sbr.rel (%p301) target = $region36
        $region35: #{tpu_custom_call.1} parent=11 // pred_region
          _
        $region36: #{tpu_custom_call.1} parent=11 // pred_fallthru
          _
        // Predicated region
        $region37: #{tpu_custom_call.1} parent=11 // pred_check
          %p304 = pneg %p245
        $region38: #{tpu_custom_call.1} parent=11 // pred_check_branch
          %306 = sbr.rel (%p304) target = $region40
        $region39: #{tpu_custom_call.1} parent=11 // pred_region
          _
        $region40: #{tpu_custom_call.1} parent=11 // pred_fallthru
          _
      $region12: #{tpu_custom_call.1} parent=5 // pred_fallthru
        _
      %p307 = scmp.lt.s32.totalorder %s20, 2
      // Predicated region
      $region41: #{tpu_custom_call.1} parent=5 // pred_check
        %p308 = pneg %p307
      $region42: #{tpu_custom_call.1} parent=5 // pred_check_branch
        %310 = sbr.rel (%p308) target = $region44
      $region43: #{tpu_custom_call.1} parent=5 // pred_region
        // Predicated region
        $region45: #{tpu_custom_call.1} parent=43 // pred_check
          %p311 = pneg %p40
        $region46: #{tpu_custom_call.1} parent=43 // pred_check_branch
          %313 = sbr.rel (%p311) target = $region48
        $region47: #{tpu_custom_call.1} parent=43 // pred_region
          %p314 = scmp.lt.s32.totalorder %s20, 1
          %s315 = scalar_select %p314, %s20, 1
          %s316 = smul.addr %s315, 8
          %s317 = scalar_lea.vmem %s0, %s316
        $region48: #{tpu_custom_call.1} parent=43 // pred_fallthru
          _
        // Predicated region
        $region49: #{tpu_custom_call.1} parent=43 // pred_check
          %p318 = pneg %p66
        $region50: #{tpu_custom_call.1} parent=43 // pred_check_branch
          %320 = sbr.rel (%p318) target = $region52
        $region51: #{tpu_custom_call.1} parent=43 // pred_region
          %p321 = scmp.lt.s32.totalorder %s20, 1
          %s322 = scalar_select %p321, %s20, 1
          %s323 = smul.addr %s322, 5
          %s324 = smul.addr %s323, 8
          %s325 = scalar_lea.vmem %s1, %s324
        $region52: #{tpu_custom_call.1} parent=43 // pred_fallthru
          _
        // Predicated region
        $region53: #{tpu_custom_call.1} parent=43 // pred_check
          %p326 = pneg %p92
        $region54: #{tpu_custom_call.1} parent=43 // pred_check_branch
          %328 = sbr.rel (%p326) target = $region56
        $region55: #{tpu_custom_call.1} parent=43 // pred_region
          %p329 = scmp.lt.s32.totalorder %s20, 1
          %s330 = scalar_select %p329, %s20, 1
          %s331 = smul.addr %s330, 2
          %s332 = smul.addr %s331, 4
          %s333 = scalar_lea.vmem %s2, %s332
        $region56: #{tpu_custom_call.1} parent=43 // pred_fallthru
          _
      $region44: #{tpu_custom_call.1} parent=5 // pred_fallthru
        _
      %p334 = scmp.le.s32.totalorder 1, %s20
      %p335 = scmp.lt.s32.totalorder %s20, 3
      %p336 = pnand %p334, %p335
      %p337 = pneg %p336
      // Predicated region
      $region57: #{tpu_custom_call.1} parent=5 // pred_check
        _
      $region58: #{tpu_custom_call.1} parent=5 // pred_check_branch
        %339 = sbr.rel (%p336) target = $region60
      $region59: #{tpu_custom_call.1} parent=5 // pred_region
        %s340 = ssub.s32 %s20, 1
        %p341 = scmp.lt.s32.totalorder %s25, 1
        %s342 = scalar_select %p341, %s25, 1
        %s343 = smul.addr %s342, 8
        %s344 = scalar_lea.vmem %s0, %s343
        %p345 = pneg %p46
        %p346 = pneg %p43
        %p347 = scmp.lt.s32.totalorder %s25, 1
        %s348 = scalar_select %p347, %s25, 1
        %s349 = smul.addr %s348, 5
        %s350 = smul.addr %s349, 8
        %s351 = scalar_lea.vmem %s1, %s350
        %p352 = pneg %p72
        %p353 = pneg %p69
        %p354 = scmp.lt.s32.totalorder %s25, 1
        %s355 = scalar_select %p354, %s25, 1
        %s356 = smul.addr %s355, 2
        %s357 = smul.addr %s356, 4
        %s358 = scalar_lea.vmem %s2, %s357
        %p359 = pneg %p98
        %p360 = pneg %p95
        %p361 = pneg %p119
        %p362 = pneg %p116
        %p363 = pneg %p140
        %p364 = pneg %p137
        %p365 = pneg %p161
        %p366 = pneg %p158
        %p367 = pneg %p182
        %p368 = pneg %p179
        %p369 = pneg %p203
        %p370 = pneg %p200
        %p371 = pneg %p224
        %p372 = pneg %p221
        %p373 = pneg %p245
        %p374 = pneg %p242
        %p375 = pneg %p271
        %p376 = pneg %p268
        %s377 = sand.u32 %s258, 1
        %s378 = scalar_lea.sflag [#allocation6], %s377
        %s379 = sand.u32 %s258, 1
        %s380 = smul.addr %s379, 8
        %s381 = scalar_lea.vmem [#allocation5], %s380
        %p382 = scmp.lt.s32.totalorder %s25, 1
        %s383 = scalar_select %p382, %s25, 1
        %s384 = smul.addr %s383, 8
        %s385 = scalar_lea.vmem %s0, %s384
        %p386 = scmp.lt.s32.totalorder %s25, 1
        %s387 = scalar_select %p386, %s25, 1
        %s388 = smul.addr %s387, 5
        %s389 = smul.addr %s388, 8
        %s390 = scalar_lea.vmem %s1, %s389
        %p391 = scmp.lt.s32.totalorder %s25, 1
        %s392 = scalar_select %p391, %s25, 1
        %s393 = smul.addr %s392, 2
        %s394 = smul.addr %s393, 4
        %s395 = scalar_lea.vmem %s2, %s394
        %v396 = vld [vmem:[%s3] sm:$0xf]
        %v397 = vld [vmem:[%s385] sm:$0xff]
        %v398 = vld [vmem:[%s4] sm:$0xf]
        %v399 = vld [vmem:[%s390] sm:$0xff]
        %v400 = vld [vmem:[%s390 + $0x8] sm:$0xff]
        %v401 = vld [vmem:[%s390 + $0x10] sm:$0xff]
        %v402 = vld [vmem:[%s390 + $0x18] sm:$0xff]
        %v403 = vld [vmem:[%s390 + $0x20] sm:$0xf]
        %vm404 = vcmask 293888
        %v406 = vsel %vm404, %v398, 0
        %vm408 = vcmask 1043456
        %v410 = vsel %vm408, %v403, 0
        %412 = vmatprep.subr.mxu0 0.0
        %413 = vmatpush1.msra.mxu0 0.0
        %414 = vmatprep.subr.mxu0 0.0
        %415 = vmatpush1.msra.mxu0 0.0
        %416 = vmatprep.subr.mxu0 0.0
        %417 = vmatpush1.msra.mxu0 0.0
        %418 = vmatprep.subr.mxu0 0.0
        %419 = vmatpush1.msra.mxu0 0.0
        %420 = vmatprep.subr.mxu0 0.0
        %421 = vmatpush1.msra.mxu0 0.0
        %422 = vmatprep.subr.mxu0 0.0
        %423 = vmatpush1.msra.mxu0 0.0
        %424 = vmatprep.subr.mxu0 0.0
        %425 = vmatpush1.msra.mxu0 0.0
        %426 = vmatprep.subr.mxu0 0.0
        %427 = vmatpush1.msra.mxu0 0.0
        %428 = vmatprep.subr.mxu0 0.0
        %429 = vmatpush1.msra.mxu0 0.0
        %430 = vmatprep.subr.mxu0 0.0
        %431 = vmatpush1.msra.mxu0 0.0
        %432 = vmatprep.subr.mxu0 0.0
        %433 = vmatpush1.msra.mxu0 0.0
        %434 = vmatprep.subr.mxu0 0.0
        %435 = vmatpush1.msra.mxu0 %v410
        %436 = vmatprep.subr.mxu0 0.0
        %437 = vmatpush1.msra.mxu0 %v402
        %438 = vmatprep.subr.mxu0 0.0
        %439 = vmatpush1.msra.mxu0 %v401
        %440 = vmatprep.subr.mxu0 0.0
        %441 = vmatpush1.msra.mxu0 %v400
        %442 = vmatprep.subr.mxu0 0.0
        %443 = vmatpush1.msra.mxu0 %v399
        %444 = vmatprep.subr.mxu0 0.0
        %445 = vmatpush2.msra.mxu0 0.0
        %446 = vmatprep.subr.mxu0 0.0
        %447 = vmatpush2.msra.mxu0 0.0
        %448 = vmatprep.subr.mxu0 0.0
        %449 = vmatpush2.msra.mxu0 0.0
        %450 = vmatprep.subr.mxu0 0.0
        %451 = vmatpush2.msra.mxu0 0.0
        %452 = vmatprep.subr.mxu0 0.0
        %453 = vmatpush2.msra.mxu0 0.0
        %454 = vmatprep.subr.mxu0 0.0
        %455 = vmatpush2.msra.mxu0 0.0
        %456 = vmatprep.subr.mxu0 0.0
        %457 = vmatpush2.msra.mxu0 0.0
        %458 = vmatprep.subr.mxu0 0.0
        %459 = vmatpush2.msra.mxu0 0.0
        %460 = vmatprep.subr.mxu0 0.0
        %461 = vmatpush2.msra.mxu0 0.0
        %462 = vmatprep.subr.mxu0 0.0
        %463 = vmatpush2.msra.mxu0 0.0
        %464 = vmatprep.subr.mxu0 0.0
        %465 = vmatpush2.msra.mxu0 0.0
        %466 = vmatprep.subr.mxu0 0.0
        %467 = vmatpush2.msra.mxu0 0.0
        %468 = vmatprep.subr.mxu0 0.0
        %469 = vmatpush2.msra.mxu0 0.0
        %470 = vmatprep.subr.mxu0 0.0
        %471 = vmatpush2.msra.mxu0 0.0
        %472 = vmatprep.subr.mxu0 0.0
        %473 = vmatpush2.msra.mxu0 0.0
        %474 = vmatprep.subr.mxu0 0.0
        %475 = vmatpush2.msra.mxu0 0.0
        %476 = vmatprep.mubr.f32.mxu0 0.0
        %477 = vmatmul.mubr.f32.gmra.mxu0 %v406
        %v478 = vpop.f32.mrf.mxu0
        %v479 = vadd.f32 0.0, %v478
        %v480 = vpop.f32.mrf.mxu0
        %481 = vdwg.mxu0
        %vm482 = vcmask 64512
        %v484 = vsel %vm482, %v396, 0
        %486 = vmatprep.subr.mxu0 0.0
        %487 = vmatpush1.msra.mxu0 0.0
        %488 = vmatprep.subr.mxu0 0.0
        %489 = vmatpush1.msra.mxu0 0.0
        %490 = vmatprep.subr.mxu0 0.0
        %491 = vmatpush1.msra.mxu0 0.0
        %492 = vmatprep.subr.mxu0 0.0
        %493 = vmatpush1.msra.mxu0 0.0
        %494 = vmatprep.subr.mxu0 0.0
        %495 = vmatpush1.msra.mxu0 0.0
        %496 = vmatprep.subr.mxu0 0.0
        %497 = vmatpush1.msra.mxu0 0.0
        %498 = vmatprep.subr.mxu0 0.0
        %499 = vmatpush1.msra.mxu0 0.0
        %500 = vmatprep.subr.mxu0 0.0
        %501 = vmatpush1.msra.mxu0 0.0
        %502 = vmatprep.subr.mxu0 0.0
        %503 = vmatpush1.msra.mxu0 0.0
        %504 = vmatprep.subr.mxu0 0.0
        %505 = vmatpush1.msra.mxu0 0.0
        %506 = vmatprep.subr.mxu0 0.0
        %507 = vmatpush1.msra.mxu0 0.0
        %508 = vmatprep.subr.mxu0 0.0
        %509 = vmatpush1.msra.mxu0 0.0
        %510 = vmatprep.subr.mxu0 0.0
        %511 = vmatpush1.msra.mxu0 0.0
        %512 = vmatprep.subr.mxu0 0.0
        %513 = vmatpush1.msra.mxu0 0.0
        %514 = vmatprep.subr.mxu0 0.0
        %515 = vmatpush1.msra.mxu0 0.0
        %516 = vmatprep.subr.mxu0 0.0
        %517 = vmatpush1.msra.mxu0 %v397
        %518 = vmatprep.subr.mxu0 0.0
        %519 = vmatpush2.msra.mxu0 0.0
        %520 = vmatprep.subr.mxu0 0.0
        %521 = vmatpush2.msra.mxu0 0.0
        %522 = vmatprep.subr.mxu0 0.0
        %523 = vmatpush2.msra.mxu0 0.0
        %524 = vmatprep.subr.mxu0 0.0
        %525 = vmatpush2.msra.mxu0 0.0
        %526 = vmatprep.subr.mxu0 0.0
        %527 = vmatpush2.msra.mxu0 0.0
        %528 = vmatprep.subr.mxu0 0.0
        %529 = vmatpush2.msra.mxu0 0.0
        %530 = vmatprep.subr.mxu0 0.0
        %531 = vmatpush2.msra.mxu0 0.0
        %532 = vmatprep.subr.mxu0 0.0
        %533 = vmatpush2.msra.mxu0 0.0
        %534 = vmatprep.subr.mxu0 0.0
        %535 = vmatpush2.msra.mxu0 0.0
        %536 = vmatprep.subr.mxu0 0.0
        %537 = vmatpush2.msra.mxu0 0.0
        %538 = vmatprep.subr.mxu0 0.0
        %539 = vmatpush2.msra.mxu0 0.0
        %540 = vmatprep.subr.mxu0 0.0
        %541 = vmatpush2.msra.mxu0 0.0
        %542 = vmatprep.subr.mxu0 0.0
        %543 = vmatpush2.msra.mxu0 0.0
        %544 = vmatprep.subr.mxu0 0.0
        %545 = vmatpush2.msra.mxu0 0.0
        %546 = vmatprep.subr.mxu0 0.0
        %547 = vmatpush2.msra.mxu0 0.0
        %548 = vmatprep.subr.mxu0 0.0
        %549 = vmatpush2.msra.mxu0 0.0
        %550 = vmatprep.mubr.f32.mxu0 0.0
        %551 = vmatmul.mubr.f32.gmra.mxu0 %v484
        %v552 = vpop.f32.mrf.mxu0
        %v553 = vadd.f32 %v479, %v552
        %v554 = vpop.f32.mrf.mxu0
        %555 = vdwg.mxu0
        %v556 = vld [vmem:[%s6] sm:$0xf]
        %558 = vset.pattern.permute.xlu0 0
        %559 = vperm.xlu0 %558, %v556
        %v560 = vpop.permute.xlu0 %559
        %v562 = vadd.f32 %v553, %v560
        %v563 = vmax.f32 %v562, 0.0
        %v564 = vld [vmem:[%s5] sm:$0x1]
        %s565 = sld [smem:[#allocation4]]
        %v566 = vstv %s565
        %vm567 = vcmask 31744
        %v569 = vsel %vm567, %v564, 0
        %v572 = vsel %vm408, %v563, 0
        %574 = vmatprep.subr.mxu0 0.0
        %575 = vmatpush1.msra.mxu0 0.0
        %576 = vmatprep.subr.mxu0 0.0
        %577 = vmatpush1.msra.mxu0 0.0
        %578 = vmatprep.subr.mxu0 0.0
        %579 = vmatpush1.msra.mxu0 0.0
        %580 = vmatprep.subr.mxu0 0.0
        %581 = vmatpush1.msra.mxu0 0.0
        %582 = vmatprep.subr.mxu0 0.0
        %583 = vmatpush1.msra.mxu0 0.0
        %584 = vmatprep.subr.mxu0 0.0
        %585 = vmatpush1.msra.mxu0 0.0
        %586 = vmatprep.subr.mxu0 0.0
        %587 = vmatpush1.msra.mxu0 0.0
        %588 = vmatprep.subr.mxu0 0.0
        %589 = vmatpush1.msra.mxu0 0.0
        %590 = vmatprep.subr.mxu0 0.0
        %591 = vmatpush1.msra.mxu0 0.0
        %592 = vmatprep.subr.mxu0 0.0
        %593 = vmatpush1.msra.mxu0 0.0
        %594 = vmatprep.subr.mxu0 0.0
        %595 = vmatpush1.msra.mxu0 0.0
        %596 = vmatprep.subr.mxu0 0.0
        %597 = vmatpush1.msra.mxu0 0.0
        %598 = vmatprep.subr.mxu0 0.0
        %599 = vmatpush1.msra.mxu0 0.0
        %600 = vmatprep.subr.mxu0 0.0
        %601 = vmatpush1.msra.mxu0 0.0
        %602 = vmatprep.subr.mxu0 0.0
        %603 = vmatpush1.msra.mxu0 0.0
        %604 = vmatprep.subr.mxu0 0.0
        %605 = vmatpush1.msra.mxu0 %v572
        %606 = vmatprep.subr.mxu0 0.0
        %607 = vmatpush2.msra.mxu0 0.0
        %608 = vmatprep.subr.mxu0 0.0
        %609 = vmatpush2.msra.mxu0 0.0
        %610 = vmatprep.subr.mxu0 0.0
        %611 = vmatpush2.msra.mxu0 0.0
        %612 = vmatprep.subr.mxu0 0.0
        %613 = vmatpush2.msra.mxu0 0.0
        %614 = vmatprep.subr.mxu0 0.0
        %615 = vmatpush2.msra.mxu0 0.0
        %616 = vmatprep.subr.mxu0 0.0
        %617 = vmatpush2.msra.mxu0 0.0
        %618 = vmatprep.subr.mxu0 0.0
        %619 = vmatpush2.msra.mxu0 0.0
        %620 = vmatprep.subr.mxu0 0.0
        %621 = vmatpush2.msra.mxu0 0.0
        %622 = vmatprep.subr.mxu0 0.0
        %623 = vmatpush2.msra.mxu0 0.0
        %624 = vmatprep.subr.mxu0 0.0
        %625 = vmatpush2.msra.mxu0 0.0
        %626 = vmatprep.subr.mxu0 0.0
        %627 = vmatpush2.msra.mxu0 0.0
        %628 = vmatprep.subr.mxu0 0.0
        %629 = vmatpush2.msra.mxu0 0.0
        %630 = vmatprep.subr.mxu0 0.0
        %631 = vmatpush2.msra.mxu0 0.0
        %632 = vmatprep.subr.mxu0 0.0
        %633 = vmatpush2.msra.mxu0 0.0
        %634 = vmatprep.subr.mxu0 0.0
        %635 = vmatpush2.msra.mxu0 0.0
        %636 = vmatprep.subr.mxu0 0.0
        %637 = vmatpush2.msra.mxu0 0.0
        %638 = vmatprep.mubr.f32.mxu0 0.0
        %639 = vmatmul.mubr.f32.gmra.mxu0 %v569
        %v640 = vpop.f32.mrf.mxu0
        %v641 = vadd.f32 %v566, %v640
        %v642 = vpop.f32.mrf.mxu0
        %643 = vdwg.mxu0
        %v644 = vsub.f32 0.0, %v641
        %v645 = vmul.f32 %v644, 1.442695
        %v646 = vpow.pop %v645
        %v647 = vadd.f32 %v646, 1.0
        %v648 = vrcp.pop %v647
        %v649 = vmul.f32 1.0, %v648
        %vm650 = vcmask 57344
        %651 = vst.msk [vmem:[#allocation2] sm:$0x1] %vm650, %v649
        %653 = vrot.lane.b32.xlu0 %v649, 120
        %v654 = vpop.permute.xlu0 %653
        %656 = vst.msk [vmem:[#allocation2 + $0x1] sm:$0x1] %vm650, %v654
        %657 = vrot.lane.b32.xlu0 %v649, 112
        %v658 = vpop.permute.xlu0 %657
        %660 = vst.msk [vmem:[#allocation2 + $0x2] sm:$0x1] %vm650, %v658
        %661 = vrot.lane.b32.xlu0 %v649, 104
        %v662 = vpop.permute.xlu0 %661
        %664 = vst.msk [vmem:[#allocation2 + $0x3] sm:$0x1] %vm650, %v662
        %665 = vrot.lane.b32.xlu0 %v649, 96
        %v666 = vpop.permute.xlu0 %665
        %668 = vst.msk [vmem:[#allocation2 + $0x4] sm:$0x1] %vm650, %v666
        %669 = vrot.lane.b32.xlu0 %v649, 88
        %v670 = vpop.permute.xlu0 %669
        %672 = vst.msk [vmem:[#allocation2 + $0x5] sm:$0x1] %vm650, %v670
        %673 = vrot.lane.b32.xlu0 %v649, 80
        %v674 = vpop.permute.xlu0 %673
        %676 = vst.msk [vmem:[#allocation2 + $0x6] sm:$0x1] %vm650, %v674
        %677 = vrot.lane.b32.xlu0 %v649, 72
        %v678 = vpop.permute.xlu0 %677
        %680 = vst.msk [vmem:[#allocation2 + $0x7] sm:$0x1] %vm650, %v678
        %v681 = vld [vmem:[#allocation2] sm:$0xff]
        %v682 = vld [vmem:[%s9] sm:$0xff]
        %v684 = vsel %vm482, %v681, 0
        %686 = vmatprep.subr.mxu0 0.0
        %687 = vmatpush1.msra.mxu0 0.0
        %688 = vmatprep.subr.mxu0 0.0
        %689 = vmatpush1.msra.mxu0 0.0
        %690 = vmatprep.subr.mxu0 0.0
        %691 = vmatpush1.msra.mxu0 0.0
        %692 = vmatprep.subr.mxu0 0.0
        %693 = vmatpush1.msra.mxu0 0.0
        %694 = vmatprep.subr.mxu0 0.0
        %695 = vmatpush1.msra.mxu0 0.0
        %696 = vmatprep.subr.mxu0 0.0
        %697 = vmatpush1.msra.mxu0 0.0
        %698 = vmatprep.subr.mxu0 0.0
        %699 = vmatpush1.msra.mxu0 0.0
        %700 = vmatprep.subr.mxu0 0.0
        %701 = vmatpush1.msra.mxu0 0.0
        %702 = vmatprep.subr.mxu0 0.0
        %703 = vmatpush1.msra.mxu0 0.0
        %704 = vmatprep.subr.mxu0 0.0
        %705 = vmatpush1.msra.mxu0 0.0
        %706 = vmatprep.subr.mxu0 0.0
        %707 = vmatpush1.msra.mxu0 0.0
        %708 = vmatprep.subr.mxu0 0.0
        %709 = vmatpush1.msra.mxu0 0.0
        %710 = vmatprep.subr.mxu0 0.0
        %711 = vmatpush1.msra.mxu0 0.0
        %712 = vmatprep.subr.mxu0 0.0
        %713 = vmatpush1.msra.mxu0 0.0
        %714 = vmatprep.subr.mxu0 0.0
        %715 = vmatpush1.msra.mxu0 0.0
        %716 = vmatprep.subr.mxu0 0.0
        %717 = vmatpush1.msra.mxu0 %v682
        %718 = vmatprep.subr.mxu0 0.0
        %719 = vmatpush2.msra.mxu0 0.0
        %720 = vmatprep.subr.mxu0 0.0
        %721 = vmatpush2.msra.mxu0 0.0
        %722 = vmatprep.subr.mxu0 0.0
        %723 = vmatpush2.msra.mxu0 0.0
        %724 = vmatprep.subr.mxu0 0.0
        %725 = vmatpush2.msra.mxu0 0.0
        %726 = vmatprep.subr.mxu0 0.0
        %727 = vmatpush2.msra.mxu0 0.0
        %728 = vmatprep.subr.mxu0 0.0
        %729 = vmatpush2.msra.mxu0 0.0
        %730 = vmatprep.subr.mxu0 0.0
        %731 = vmatpush2.msra.mxu0 0.0
        %732 = vmatprep.subr.mxu0 0.0
        %733 = vmatpush2.msra.mxu0 0.0
        %734 = vmatprep.subr.mxu0 0.0
        %735 = vmatpush2.msra.mxu0 0.0
        %736 = vmatprep.subr.mxu0 0.0
        %737 = vmatpush2.msra.mxu0 0.0
        %738 = vmatprep.subr.mxu0 0.0
        %739 = vmatpush2.msra.mxu0 0.0
        %740 = vmatprep.subr.mxu0 0.0
        %741 = vmatpush2.msra.mxu0 0.0
        %742 = vmatprep.subr.mxu0 0.0
        %743 = vmatpush2.msra.mxu0 0.0
        %744 = vmatprep.subr.mxu0 0.0
        %745 = vmatpush2.msra.mxu0 0.0
        %746 = vmatprep.subr.mxu0 0.0
        %747 = vmatpush2.msra.mxu0 0.0
        %748 = vmatprep.subr.mxu0 0.0
        %749 = vmatpush2.msra.mxu0 0.0
        %750 = vmatprep.mubr.f32.mxu0 0.0
        %751 = vmatmul.mubr.f32.gmra.mxu0 %v684
        %v752 = vpop.f32.mrf.mxu0
        %v753 = vadd.f32 0.0, %v752
        %v754 = vpop.f32.mrf.mxu0
        %755 = vdwg.mxu0
        %v756 = vld [vmem:[%s8] sm:$0xff]
        %v757 = vld [vmem:[%s8 + $0x8] sm:$0xff]
        %v759 = vsel %vm482, %v756, 0
        %v762 = vsel %vm482, %v757, 0
        %764 = vmatprep.subr.mxu0 0.0
        %765 = vmatpush1.msra.mxu0 0.0
        %766 = vmatprep.subr.mxu0 0.0
        %767 = vmatpush1.msra.mxu0 0.0
        %768 = vmatprep.subr.mxu0 0.0
        %769 = vmatpush1.msra.mxu0 0.0
        %770 = vmatprep.subr.mxu0 0.0
        %771 = vmatpush1.msra.mxu0 0.0
        %772 = vmatprep.subr.mxu0 0.0
        %773 = vmatpush1.msra.mxu0 0.0
        %774 = vmatprep.subr.mxu0 0.0
        %775 = vmatpush1.msra.mxu0 0.0
        %776 = vmatprep.subr.mxu0 0.0
        %777 = vmatpush1.msra.mxu0 0.0
        %778 = vmatprep.subr.mxu0 0.0
        %779 = vmatpush1.msra.mxu0 0.0
        %780 = vmatprep.subr.mxu0 0.0
        %781 = vmatpush1.msra.mxu0 0.0
        %782 = vmatprep.subr.mxu0 0.0
        %783 = vmatpush1.msra.mxu0 0.0
        %784 = vmatprep.subr.mxu0 0.0
        %785 = vmatpush1.msra.mxu0 0.0
        %786 = vmatprep.subr.mxu0 0.0
        %787 = vmatpush1.msra.mxu0 0.0
        %788 = vmatprep.subr.mxu0 0.0
        %789 = vmatpush1.msra.mxu0 0.0
        %790 = vmatprep.subr.mxu0 0.0
        %791 = vmatpush1.msra.mxu0 0.0
        %792 = vmatprep.subr.mxu0 0.0
        %793 = vmatpush1.msra.mxu0 0.0
        %794 = vmatprep.subr.mxu0 0.0
        %795 = vmatpush1.msra.mxu0 %v753
        %796 = vmatprep.subr.mxu0 0.0
        %797 = vmatpush2.msra.mxu0 0.0
        %798 = vmatprep.subr.mxu0 0.0
        %799 = vmatpush2.msra.mxu0 0.0
        %800 = vmatprep.subr.mxu0 0.0
        %801 = vmatpush2.msra.mxu0 0.0
        %802 = vmatprep.subr.mxu0 0.0
        %803 = vmatpush2.msra.mxu0 0.0
        %804 = vmatprep.subr.mxu0 0.0
        %805 = vmatpush2.msra.mxu0 0.0
        %806 = vmatprep.subr.mxu0 0.0
        %807 = vmatpush2.msra.mxu0 0.0
        %808 = vmatprep.subr.mxu0 0.0
        %809 = vmatpush2.msra.mxu0 0.0
        %810 = vmatprep.subr.mxu0 0.0
        %811 = vmatpush2.msra.mxu0 0.0
        %812 = vmatprep.subr.mxu0 0.0
        %813 = vmatpush2.msra.mxu0 0.0
        %814 = vmatprep.subr.mxu0 0.0
        %815 = vmatpush2.msra.mxu0 0.0
        %816 = vmatprep.subr.mxu0 0.0
        %817 = vmatpush2.msra.mxu0 0.0
        %818 = vmatprep.subr.mxu0 0.0
        %819 = vmatpush2.msra.mxu0 0.0
        %820 = vmatprep.subr.mxu0 0.0
        %821 = vmatpush2.msra.mxu0 0.0
        %822 = vmatprep.subr.mxu0 0.0
        %823 = vmatpush2.msra.mxu0 0.0
        %824 = vmatprep.subr.mxu0 0.0
        %825 = vmatpush2.msra.mxu0 0.0
        %826 = vmatprep.subr.mxu0 0.0
        %827 = vmatpush2.msra.mxu0 0.0
        %828 = vmatprep.mubr.f32.mxu0 0.0
        %829 = vmatmul.mubr.f32.gmra.mxu0 %v759
        %v830 = vpop.f32.mrf.mxu0
        %v831 = vadd.f32 0.0, %v830
        %v832 = vpop.f32.mrf.mxu0
        %833 = vmatprep.mubr.f32.mxu0 0.0
        %834 = vmatmul.mubr.f32.gmra.mxu0 %v762
        %v835 = vpop.f32.mrf.mxu0
        %v836 = vadd.f32 0.0, %v835
        %v837 = vpop.f32.mrf.mxu0
        %838 = vdwg.mxu0
        %v839 = vlaneseq
        %vm840 = vcmp.ge.s32.totalorder %v839, 0
        %vm841 = vcmp.lt.s32.totalorder %v839, 16
        %vm842 = vmand %vm840, %vm841
        %843 = vst.msk [vmem:[#allocation3] sm:$0x1] %vm842, %v831
        %v846 = vunpack.c.l.s4 1966171168
        %v847 = vunpack.c.0.s8 %v846
        %v848 = vlaneseq
        %v849 = vshrl.u32 %v848, 7
        %v850 = vsub.s32 %v847, %v849
        %v851 = vrot.slane %v831, %v850
        %v852 = vcombine.high %v851, %v851
        %v854 = vunpack.c.l.s4 1966171168
        %v855 = vunpack.c.0.s8 %v854
        %v856 = vlaneseq
        %v857 = vshrl.u32 %v856, 7
        %v858 = vsub.s32 %v855, %v857
        %v859 = vrot.slane %v851, %v858
        %v861 = vunpack.c.l.s4 1966171168
        %v862 = vunpack.c.0.s8 %v861
        %v863 = vlaneseq
        %v864 = vshrl.u32 %v863, 7
        %v865 = vsub.s32 %v862, %v864
        %v866 = vrot.slane %v852, %v865
        %867 = vrot.lane.b32.xlu0 %v866, 16
        %v868 = vpop.permute.xlu0 %867
        %vm870 = vcmp.ge.s32.totalorder %v839, 16
        %vm871 = vcmp.lt.s32.totalorder %v839, 32
        %vm872 = vmand %vm870, %vm871
        %873 = vst.msk [vmem:[#allocation3] sm:$0x1] %vm872, %v868
        %v874 = vcombine.high %v859, %v859
        %875 = vrot.lane.b32.xlu0 %v874, 32
        %v876 = vpop.permute.xlu0 %875
        %vm878 = vcmp.ge.s32.totalorder %v839, 32
        %vm879 = vcmp.lt.s32.totalorder %v839, 48
        %vm880 = vmand %vm878, %vm879
        %881 = vst.msk [vmem:[#allocation3] sm:$0x1] %vm880, %v876
        %v882 = vcombine.high %v866, %v866
        %883 = vrot.lane.b32.xlu0 %v882, 48
        %v884 = vpop.permute.xlu0 %883
        %vm886 = vcmp.ge.s32.totalorder %v839, 48
        %vm887 = vcmp.lt.s32.totalorder %v839, 64
        %vm888 = vmand %vm886, %vm887
        %889 = vst.msk [vmem:[#allocation3] sm:$0x1] %vm888, %v884
        %v890 = vcombine.high %v831, %v831
        %v892 = vunpack.c.l.s4 1966171168
        %v893 = vunpack.c.0.s8 %v892
        %v894 = vlaneseq
        %v895 = vshrl.u32 %v894, 7
        %v896 = vsub.s32 %v893, %v895
        %v897 = vrot.slane %v890, %v896
        %v899 = vunpack.c.l.s4 1966171168
        %v900 = vunpack.c.0.s8 %v899
        %v901 = vlaneseq
        %v902 = vshrl.u32 %v901, 7
        %v903 = vsub.s32 %v900, %v902
        %v904 = vrot.slane %v897, %v903
        %905 = vrot.lane.b32.xlu0 %v904, 64
        %v906 = vpop.permute.xlu0 %905
        %vm908 = vcmp.ge.s32.totalorder %v839, 64
        %vm909 = vcmp.lt.s32.totalorder %v839, 80
        %vm910 = vmand %vm908, %vm909
        %911 = vst.msk [vmem:[#allocation3] sm:$0x1] %vm910, %v906
        %v912 = vcombine.high %v897, %v897
        %v914 = vunpack.c.l.s4 1966171168
        %v915 = vunpack.c.0.s8 %v914
        %v916 = vlaneseq
        %v917 = vshrl.u32 %v916, 7
        %v918 = vsub.s32 %v915, %v917
        %v919 = vrot.slane %v912, %v918
        %920 = vrot.lane.b32.xlu0 %v919, 80
        %v921 = vpop.permute.xlu0 %920
        %vm923 = vcmp.ge.s32.totalorder %v839, 80
        %vm924 = vcmp.lt.s32.totalorder %v839, 96
        %vm925 = vmand %vm923, %vm924
        %926 = vst.msk [vmem:[#allocation3] sm:$0x1] %vm925, %v921
        %v927 = vcombine.high %v904, %v904
        %928 = vrot.lane.b32.xlu0 %v927, 96
        %v929 = vpop.permute.xlu0 %928
        %vm931 = vcmp.ge.s32.totalorder %v839, 96
        %vm932 = vcmp.lt.s32.totalorder %v839, 112
        %vm933 = vmand %vm931, %vm932
        %934 = vst.msk [vmem:[#allocation3] sm:$0x1] %vm933, %v929
        %v935 = vcombine.high %v919, %v919
        %936 = vrot.lane.b32.xlu0 %v935, 112
        %v937 = vpop.permute.xlu0 %936
        %vm939 = vcmp.ge.s32.totalorder %v839, 112
        %vm940 = vcmp.lt.s32.totalorder %v839, 128
        %vm941 = vmand %vm939, %vm940
        %942 = vst.msk [vmem:[#allocation3] sm:$0x1] %vm941, %v937
        %943 = vst.msk [vmem:[#allocation3 + $0x1] sm:$0x1] %vm842, %v836
        %v946 = vunpack.c.l.s4 1966171168
        %v947 = vunpack.c.0.s8 %v946
        %v948 = vlaneseq
        %v949 = vshrl.u32 %v948, 7
        %v950 = vsub.s32 %v947, %v949
        %v951 = vrot.slane %v836, %v950
        %v952 = vcombine.high %v951, %v951
        %v954 = vunpack.c.l.s4 1966171168
        %v955 = vunpack.c.0.s8 %v954
        %v956 = vlaneseq
        %v957 = vshrl.u32 %v956, 7
        %v958 = vsub.s32 %v955, %v957
        %v959 = vrot.slane %v951, %v958
        %v961 = vunpack.c.l.s4 1966171168
        %v962 = vunpack.c.0.s8 %v961
        %v963 = vlaneseq
        %v964 = vshrl.u32 %v963, 7
        %v965 = vsub.s32 %v962, %v964
        %v966 = vrot.slane %v952, %v965
        %967 = vrot.lane.b32.xlu0 %v966, 16
        %v968 = vpop.permute.xlu0 %967
        %970 = vst.msk [vmem:[#allocation3 + $0x1] sm:$0x1] %vm872, %v968
        %v971 = vcombine.high %v959, %v959
        %972 = vrot.lane.b32.xlu0 %v971, 32
        %v973 = vpop.permute.xlu0 %972
        %975 = vst.msk [vmem:[#allocation3 + $0x1] sm:$0x1] %vm880, %v973
        %v976 = vcombine.high %v966, %v966
        %977 = vrot.lane.b32.xlu0 %v976, 48
        %v978 = vpop.permute.xlu0 %977
        %980 = vst.msk [vmem:[#allocation3 + $0x1] sm:$0x1] %vm888, %v978
        %v981 = vcombine.high %v836, %v836
        %v983 = vunpack.c.l.s4 1966171168
        %v984 = vunpack.c.0.s8 %v983
        %v985 = vlaneseq
        %v986 = vshrl.u32 %v985, 7
        %v987 = vsub.s32 %v984, %v986
        %v988 = vrot.slane %v981, %v987
        %v990 = vunpack.c.l.s4 1966171168
        %v991 = vunpack.c.0.s8 %v990
        %v992 = vlaneseq
        %v993 = vshrl.u32 %v992, 7
        %v994 = vsub.s32 %v991, %v993
        %v995 = vrot.slane %v988, %v994
        %996 = vrot.lane.b32.xlu0 %v995, 64
        %v997 = vpop.permute.xlu0 %996
        %999 = vst.msk [vmem:[#allocation3 + $0x1] sm:$0x1] %vm910, %v997
        %v1000 = vcombine.high %v988, %v988
        %v1002 = vunpack.c.l.s4 1966171168
        %v1003 = vunpack.c.0.s8 %v1002
        %v1004 = vlaneseq
        %v1005 = vshrl.u32 %v1004, 7
        %v1006 = vsub.s32 %v1003, %v1005
        %v1007 = vrot.slane %v1000, %v1006
        %1008 = vrot.lane.b32.xlu0 %v1007, 80
        %v1009 = vpop.permute.xlu0 %1008
        %1011 = vst.msk [vmem:[#allocation3 + $0x1] sm:$0x1] %vm925, %v1009
        %v1012 = vcombine.high %v995, %v995
        %1013 = vrot.lane.b32.xlu0 %v1012, 96
        %v1014 = vpop.permute.xlu0 %1013
        %1016 = vst.msk [vmem:[#allocation3 + $0x1] sm:$0x1] %vm933, %v1014
        %v1017 = vcombine.high %v1007, %v1007
        %1018 = vrot.lane.b32.xlu0 %v1017, 112
        %v1019 = vpop.permute.xlu0 %1018
        %1021 = vst.msk [vmem:[#allocation3 + $0x1] sm:$0x1] %vm941, %v1019
        %v1022 = vld [vmem:[#allocation3] sm:$0x3]
        %v1023 = vld [vmem:[%s395] sm:$0xff]
        %v1025 = vlaneseq
        %v1026 = vshrl.u32 %v1025, 7
        %v1027 = vsub.s32 0, %v1026
        %v1028 = vrot.slane %v1022, %v1027
        %v1029 = vlaneseq
        %v1030 = vshrl.u32 %v1029, 7
        %v1031 = vsub.s32 1, %v1030
        %v1032 = vrot.slane %v1022, %v1031
        %v1036 = vcombine.high %v1023, %v1023
        %v1038 = vmul.f32 %v1028, %v1023
        %v1039 = vmul.f32 %v1032, %v1036
        %v1042 = vcombine.low %v1038, %v1039
        %1044 = vst [vmem:[%s381] sm:$0xff] %v1042
        %s1045 = sand.u32 %s258, 1
        %s1046 = scalar_lea.sflag [#allocation6], %s1045
        %s1047 = sand.u32 %s258, 1
        %s1048 = smul.addr %s1047, 8
        %s1049 = scalar_lea.vmem [#allocation5], %s1048
        // Predicated region
        $region61: #{tpu_custom_call.1} parent=59 // pred_check
          %p1050 = pneg %p268
        $region62: #{tpu_custom_call.1} parent=59 // pred_check_branch
          %1052 = sbr.rel (%p1050) target = $region64
        $region63: #{tpu_custom_call.1} parent=59 // pred_region
          %s1054 = ssub.s32 128, 128
          %1055 = vsyncadd %s1046, %s1054
          %s1056 = smul.addr %s25, 2
          %s1057 = smul.addr %s1056, 64
          %s1058 = scalar_lea.hbm %s10, %s1057
          %s1060 = sshll.u32 %s1049, 4
          %s1061 = int_to_ptr.vmem [resolvable:$true] %s1060
          %1063 = dma.vmem_to_hbm [thread:$0]  %s1061, 128, %s1058, %s1046
        $region64: #{tpu_custom_call.1} parent=59 // pred_fallthru
          _
      $region60: #{tpu_custom_call.1} parent=5 // pred_fallthru
        _
      %p1064 = scmp.le.s32.totalorder 2, %s20
      // Predicated region
      $region65: #{tpu_custom_call.1} parent=5 // pred_check
        %p1065 = pneg %p1064
      $region66: #{tpu_custom_call.1} parent=5 // pred_check_branch
        %1067 = sbr.rel (%p1065) target = $region68
      $region67: #{tpu_custom_call.1} parent=5 // pred_region
        %s1068 = ssub.s32 %s20, 2
        // Predicated region
        $region69: #{tpu_custom_call.1} parent=67 // pred_check
          %p1069 = pneg %p274
        $region70: #{tpu_custom_call.1} parent=67 // pred_check_branch
          %1071 = sbr.rel (%p1069) target = $region72
        $region71: #{tpu_custom_call.1} parent=67 // pred_region
          %s1072 = sand.u32 %s259, 1
          %s1073 = scalar_lea.sflag [#allocation6], %s1072
          %s1074 = sand.u32 %s259, 1
          %s1075 = smul.addr %s1074, 8
          %s1076 = scalar_lea.vmem [#allocation5], %s1075
          %1077 = dma.done %s1073, 128
        $region72: #{tpu_custom_call.1} parent=67 // pred_fallthru
          _
      $region68: #{tpu_custom_call.1} parent=5 // pred_fallthru
        _
    $region6: #{tpu_custom_call.1} parent=1 // loop_footer
      %s24 = sadd.s32 1, %s20
    $region7: #{tpu_custom_call.1} parent=1 // loop_footer_branch
      %19 = sbr.rel target = $region3
    $region8: #{tpu_custom_call.1} parent=1 // loop_exit
      _
    %1078 = vsyncpa [#allocation6], 1
    %s1079 = scalar_lea.sflag [#allocation6], 1
    %1080 = vsyncpa %s1079, 1

</llo_original>
